<compile_context>
chip_gen: v7x
topology: tpu7x:2x2x1
jax: 0.10.0
libtpu: 0.0.40
codegen_flags: <defaults>
</compile_context>

<pallas_src>
import functools

import jax
import jax.numpy as jnp
from jax import lax
from jax.experimental import pallas as pl
from jax.experimental.pallas import tpu as pltpu


def _round_up(a: int, b: int) -> int:
    return ((a + b - 1) // b) * b


def _pick_tile(dim: int, align: int, cap: int) -> int:
    """Tile size for `dim`: a multiple of `align`, <= cap (and <= the aligned
    dim).  Prefers an exact divisor of `dim` (no padding needed) as long as it
    is >= cap/2; otherwise falls back to cap (=> `dim` gets padded)."""
    cap = max(align, min(cap, _round_up(dim, align)))
    cap = cap // align * align
    if dim % align == 0:
        t = cap
        while t >= align and 2 * t >= cap:
            if dim % t == 0:
                return t
            t -= align
    return cap


def _tied_projection_kernel(*refs, has_bias, direct_out):
    """Grid (i, j, k); k is the reduction axis (innermost, 'arbitrary').

    refs = x(tm,tk), w(tn,tk), [bias(1,tn)], out(tm,tn), [acc(tm,tn) f32]
    """
    idx = 0
    x_ref = refs[idx]; idx += 1
    w_ref = refs[idx]; idx += 1
    b_ref = None
    if has_bias:
        b_ref = refs[idx]; idx += 1
    o_ref = refs[idx]; idx += 1
    acc_ref = o_ref if direct_out else refs[idx]

    k = pl.program_id(2)

    @pl.when(k == 0)
    def _():
        if has_bias:
            # Fold bias into the accumulator init: no epilogue RMW pass.
            acc_ref[...] = jnp.broadcast_to(
                b_ref[...].astype(jnp.float32), acc_ref.shape)
        else:
            acc_ref[...] = jnp.zeros_like(acc_ref)

    # x tile (tm, tk) @ w tile (tn, tk)^T : contract both on their last dim.
    acc_ref[...] += lax.dot_general(
        x_ref[...],
        w_ref[...],
        dimension_numbers=(((1,), (1,)), ((), ())),
        preferred_element_type=jnp.float32,
    )

    if not direct_out:
        @pl.when(k == pl.num_programs(2) - 1)
        def _():
            o_ref[...] = acc_ref[...].astype(o_ref.dtype)


def tied_projection(x, weight, bias=None, *, tm=1024, tn=1024, tk=512,
                    compute_dtype=None):
    """y = x @ weight.T + bias (torch.nn.functional.linear semantics)."""
    *lead, K = x.shape
    N, K_w = weight.shape
    assert K == K_w, (K, K_w)

    M = 1
    for d in lead:
        M *= d

    out_dtype = jnp.dtype(x.dtype)
    compute_dt = jnp.dtype(compute_dtype) if compute_dtype is not None else out_dtype
    has_bias = bias is not None

    # Sublane alignment for the M axis (second-to-last dim of x / out blocks):
    # 4B -> 8 rows, 2B (bf16) -> 16, 1B -> 32.
    min_itemsize = min(compute_dt.itemsize, out_dtype.itemsize)
    m_align = max(8, 32 // max(min_itemsize, 1))

    # Tile selection: prefer exact 128-aligned divisors of N/K so the shared
    # weight never needs a wrapper-side pad copy; M-padding (x only) is cheap.
    tm = _pick_tile(M, m_align, tm)
    tn = _pick_tile(N, 128, tn)
    tk = _pick_tile(K, 128, tk)

    Mp, Np, Kp = _round_up(M, tm), _round_up(N, tn), _round_up(K, tk)
    grid_i, grid_j = Mp // tm, Np // tn

    # v7x has 2 TensorCores and shards only the parallel axes: make sure the
    # (i, j) block count is >= 2 by splitting N when it collapses to 1.
    if grid_i * grid_j < 2 and Np >= 256:
        split_cap = max(128, min(tn, Np // 2) // 128 * 128)
        for t in range(split_cap, 127, -128):
            if Np % t == 0:
                tn = t
                break
        grid_j = Np // tn
    grid_k = Kp // tk

    # --- prepare operands (pad only what is genuinely ragged) -------------
    x2d = x.reshape(M, K)
    if (Mp, Kp) != (M, K):
        x2d = jnp.pad(x2d, ((0, Mp - M), (0, Kp - K)))
    w = weight
    if (Np, Kp) != (N, K):
        w = jnp.pad(weight, ((0, Np - N), (0, Kp - K)))

    if compute_dtype is not None:
        if x2d.dtype != compute_dt:
            x2d = x2d.astype(compute_dt)
        if w.dtype != compute_dt:
            w = w.astype(compute_dt)

    inputs = [x2d, w]
    in_specs = [
        pl.BlockSpec((tm, tk), lambda i, j, k: (i, k)),   # x tile
        pl.BlockSpec((tn, tk), lambda i, j, k: (j, k)),   # weight (N, K) tile
    ]
    if has_bias:
        b2d = bias.astype(jnp.float32).reshape(1, N)      # added in f32 anyway
        if Np != N:
            b2d = jnp.pad(b2d, ((0, 0), (0, Np - N)))
        inputs.append(b2d)
        in_specs.append(pl.BlockSpec((1, tn), lambda i, j, k: (0, j)))

    direct_out = out_dtype == jnp.dtype(jnp.float32)
    scratch = [] if direct_out else [pltpu.VMEM((tm, tn), jnp.float32)]
    kernel = functools.partial(
        _tied_projection_kernel, has_bias=has_bias, direct_out=direct_out)

    # Scheduler hint with the *actual* revisit traffic.
    bytes_accessed = (
        x2d.size * x2d.dtype.itemsize * grid_j
        + w.size * w.dtype.itemsize * grid_i
        + (b2d.size * b2d.dtype.itemsize * grid_i if has_bias else 0)
        + Mp * Np * out_dtype.itemsize
    )
    cost = pl.CostEstimate(
        flops=2 * M * N * K + (M * N if has_bias else 0),
        transcendentals=0,
        bytes_accessed=int(bytes_accessed),
    )

    out = pl.pallas_call(
        kernel,
        out_shape=jax.ShapeDtypeStruct((Mp, Np), out_dtype),
        grid_spec=pltpu.PrefetchScalarGridSpec(
            num_scalar_prefetch=0,
            grid=(grid_i, grid_j, grid_k),
            in_specs=in_specs,
            out_specs=pl.BlockSpec((tm, tn), lambda i, j, k: (i, j)),
            scratch_shapes=scratch,
        ),
        compiler_params=pltpu.CompilerParams(
            dimension_semantics=("parallel", "parallel", "arbitrary"),
            # Default tiles need ~16-20 MiB double-buffered; 48 MiB clears
            # v5e's 16 MiB scoped default and fits v7x's 64 MiB physical VMEM.
            vmem_limit_bytes=48 * 1024 * 1024,
        ),
        cost_estimate=cost,
    )(*inputs)

    if (Mp, Np) != (M, N):
        out = out[:M, :N]
    return out.reshape(*lead, N)


if __name__ == "__main__":
    key = jax.random.PRNGKey(0)
    k1, k2, k3, k4, k5 = jax.random.split(key, 5)

    # --- check 1: aligned shapes, multi-step K reduction (tk override) ----
    batch, seq, input_dim, output_dim = 2, 8, 256, 256
    kx, kw, kb = jax.random.split(k1, 3)
    x = jax.random.normal(kx, (batch, seq, input_dim), dtype=jnp.float32)
    weight = jax.random.normal(kw, (output_dim, input_dim), dtype=jnp.float32) * 0.02
    bias = jax.random.normal(kb, (output_dim,), dtype=jnp.float32) * 0.01

    y = jax.block_until_ready(tied_projection(x, weight, bias, tk=128))
    y_ref = x @ weight.T + bias
    assert y.shape == (batch, seq, output_dim)
    assert jnp.allclose(y, y_ref, atol=1e-4, rtol=1e-4)

    # --- check 2: ragged shapes exercise the pad/slice path ---------------
    kx2, kw2, kb2 = jax.random.split(k2, 3)
    x2 = jax.random.normal(kx2, (2, 5, 96), dtype=jnp.float32)
    w2 = jax.random.normal(kw2, (200, 96), dtype=jnp.float32) * 0.02
    b2 = jax.random.normal(kb2, (200,), dtype=jnp.float32) * 0.01
    y2 = jax.block_until_ready(tied_projection(x2, w2, b2))
    assert y2.shape == (2, 5, 200)
    assert jnp.allclose(y2, x2 @ w2.T + b2, atol=1e-4, rtol=1e-4)

    # --- check 3: no bias (bias input stream skipped entirely) ------------
    kx3, kw3 = jax.random.split(k3, 2)
    x3 = jax.random.normal(kx3, (2, 8, 128), dtype=jnp.float32)
    w3 = jax.random.normal(kw3, (256, 128), dtype=jnp.float32) * 0.02
    y3 = jax.block_until_ready(tied_projection(x3, w3, None))
    assert jnp.allclose(y3, x3 @ w3.T, atol=1e-4, rtol=1e-4)

    # --- check 4: bf16 compute path (f32 I/O, f32 accumulation) -----------
    kx4, kw4, kb4 = jax.random.split(k4, 3)
    x4 = jax.random.normal(kx4, (2, 8, 128), dtype=jnp.float32)
    w4 = jax.random.normal(kw4, (256, 128), dtype=jnp.float32) * 0.02
    b4 = jax.random.normal(kb4, (256,), dtype=jnp.float32) * 0.01
    y4 = jax.block_until_ready(
        tied_projection(x4, w4, b4, compute_dtype=jnp.bfloat16))
    assert jnp.allclose(y4, x4 @ w4.T + b4, atol=5e-2, rtol=5e-2)

    # --- check 5: bf16 end-to-end (scratch-accumulator output path) -------
    kx5, kw5, kb5 = jax.random.split(k5, 3)
    x5 = jax.random.normal(kx5, (2, 8, 128), dtype=jnp.bfloat16)
    w5 = (jax.random.normal(kw5, (256, 128), dtype=jnp.float32) * 0.02).astype(jnp.bfloat16)
    b5 = (jax.random.normal(kb5, (256,), dtype=jnp.float32) * 0.01).astype(jnp.bfloat16)
    y5 = jax.block_until_ready(tied_projection(x5, w5, b5))
    y5_ref = (x5.astype(jnp.float32) @ w5.astype(jnp.float32).T
              + b5.astype(jnp.float32))
    assert y5.dtype == jnp.bfloat16
    assert jnp.allclose(y5.astype(jnp.float32), y5_ref, atol=5e-2, rtol=5e-2)

    print("KERNEL_OK")
</pallas_src>

<mosaic_0001>
module attributes {stable_mosaic.version = 11 : i64} {
  func.func @_tied_projection_kernel(%arg0: i32, %arg1: i32, %arg2: i32, %arg3: memref<16x128xf32, #tpu.memory_space<vmem>>, %arg4: memref<128x128xf32, #tpu.memory_space<vmem>>, %arg5: memref<1x128xf32, #tpu.memory_space<vmem>>, %arg6: memref<16x128xf32, #tpu.memory_space<vmem>>) attributes {dimension_semantics = [#tpu.dimension_semantics<parallel>, #tpu.dimension_semantics<parallel>, #tpu.dimension_semantics<arbitrary>], iteration_bounds = array<i64: 1, 2, 2>, scalar_prefetch = 0 : i64, scratch_operands = 0 : i64, tpu.core_type = #tpu.core_type<tc>, window_params = [{transform_indices = @transform_0, window_bounds = array<i64: 16, 128>}, {transform_indices = @transform_1, window_bounds = array<i64: 128, 128>}, {transform_indices = @transform_2, window_bounds = array<i64: 1, 128>}, {transform_indices = @transform_3, window_bounds = array<i64: 16, 128>}]} {
    %c0_i32 = arith.constant 0 : i32
    %0 = arith.cmpi eq, %arg2, %c0_i32 : i32
    %1 = arith.extui %0 : i1 to i32
    %c0_i32_0 = arith.constant 0 : i32
    %2 = arith.cmpi ne, %1, %c0_i32_0 : i32
    scf.if %2 {
      %c0_8 = arith.constant 0 : index
      %c0_9 = arith.constant 0 : index
      %9 = vector.load %arg5[%c0_8, %c0_9] : memref<1x128xf32, #tpu.memory_space<vmem>>, vector<1x128xf32>
      %10 = vector.shape_cast %9 : vector<1x128xf32> to vector<1x128xf32>
      %11 = vector.broadcast %10 : vector<1x128xf32> to vector<16x128xf32>
      %c0_10 = arith.constant 0 : index
      %c0_11 = arith.constant 0 : index
      %12 = vector.load %arg6[%c0_10, %c0_11] : memref<16x128xf32, #tpu.memory_space<vmem>>, vector<16x128xf32>
      tpu.vector_store %arg6[%c0_10, %c0_11], %11 {strides = array<i32>} : memref<16x128xf32, #tpu.memory_space<vmem>>, vector<16x128xf32>,
    } else {
    }
    %c0 = arith.constant 0 : index
    %c0_1 = arith.constant 0 : index
    %3 = vector.load %arg6[%c0, %c0_1] : memref<16x128xf32, #tpu.memory_space<vmem>>, vector<16x128xf32>
    %c0_2 = arith.constant 0 : index
    %c0_3 = arith.constant 0 : index
    %4 = vector.load %arg3[%c0_2, %c0_3] : memref<16x128xf32, #tpu.memory_space<vmem>>, vector<16x128xf32>
    %c0_4 = arith.constant 0 : index
    %c0_5 = arith.constant 0 : index
    %5 = vector.load %arg4[%c0_4, %c0_5] : memref<128x128xf32, #tpu.memory_space<vmem>>, vector<128x128xf32>
    %cst = arith.constant dense<0.000000e+00> : vector<16x128xf32>
    %6 = tpu.matmul %4, %5, %cst {dimension_numbers = #tpu.dot_dimension_numbers<[1], [1], [0], [0], [0, 0, 1, 0], [], []>} : vector<16x128xf32>, vector<128x128xf32>, vector<16x128xf32> -> vector<16x128xf32>
    %7 = arith.addf %3, %6 : vector<16x128xf32>
    %c0_6 = arith.constant 0 : index
    %c0_7 = arith.constant 0 : index
    %8 = vector.load %arg6[%c0_6, %c0_7] : memref<16x128xf32, #tpu.memory_space<vmem>>, vector<16x128xf32>
    tpu.vector_store %arg6[%c0_6, %c0_7], %7 {strides = array<i32>} : memref<16x128xf32, #tpu.memory_space<vmem>>, vector<16x128xf32>,
    return
  }
  func.func @transform_0(%arg0: i32, %arg1: i32, %arg2: i32) -> (i32, i32) {
    %c0_i32 = arith.constant 0 : i32
    return %arg0, %arg2 : i32, i32
  }
  func.func @transform_1(%arg0: i32, %arg1: i32, %arg2: i32) -> (i32, i32) {
    %c0_i32 = arith.constant 0 : i32
    return %arg1, %arg2 : i32, i32
  }
  func.func @transform_2(%arg0: i32, %arg1: i32, %arg2: i32) -> (i32, i32) {
    %c0_i32 = arith.constant 0 : i32
    %c0_i32_0 = arith.constant 0 : i32
    return %c0_i32, %arg1 : i32, i32
  }
  func.func @transform_3(%arg0: i32, %arg1: i32, %arg2: i32) -> (i32, i32) {
    %c0_i32 = arith.constant 0 : i32
    return %arg0, %arg1 : i32, i32
  }
}

</mosaic_0001>

<llo_original>
// kernel: tpu_custom_call.1
$region0: #{tpu_custom_call.1}
  #allocation0 [shape = 'u32[]', space=smem, size = 0x4, offset = 0x4, fixed_abs, tag = 'smem constant byte address 0x4 - core index']
  #allocation1 [shape = 'u32[144,128]{1,0:T(1,128)}', space=vmem, size = 0x12000, scoped, tag = 'internal scratch']
  %s0 = inlined_call_operand.hbm [shape: f32[16,256], index: 0, kind: input, shape index: {}]
  %s1 = inlined_call_operand.hbm [shape: f32[256,256], index: 1, kind: input, shape index: {}]
  %s2 = inlined_call_operand.vmem [shape: f32[1,256], index: 2, kind: input, shape index: {}]
  %s3 = inlined_call_operand.hbm [shape: f32[16,256], index: 3, kind: output, shape index: {}]
  %s4 = sld [smem:[#allocation0]]
  $region57: #{tpu_custom_call.1} parent=0
    _
  %s6 = ssub.s32 1, %s4
  %s7 = scalar_select 0, %s6, %s4
  $region1: #{tpu_custom_call.1} parent=0
    #allocation2 [shape = 'u8[16384]{0}', space=vmem, size = 0x4000, scoped, tag = 'input window, operand 0']
    #allocation3 [shape = 's32[2]{0}', space=sflag, size = 0x8, scoped, tag = 'scoped memory for tpu_custom_call.1']
    #allocation4 [shape = 's32[2]{0}', space=sflag, size = 0x8, scoped, tag = 'scoped memory for tpu_custom_call.1']
    #allocation5 [shape = 'u8[131072]{0}', space=vmem, size = 0x20000, scoped, tag = 'input window, operand 1']
    #allocation6 [shape = 's32[2]{0}', space=sflag, size = 0x8, scoped, tag = 'scoped memory for tpu_custom_call.1']
    #allocation7 [shape = 'u8[16384]{0}', space=vmem, size = 0x4000, scoped, tag = 'output window, operand 0']
    %8 = vsyncpa [#allocation3], 0
    %s9 = scalar_lea.sflag [#allocation3], 1
    %10 = vsyncpa %s9, 0
    %11 = vsyncpa [#allocation6], 0
    %s12 = scalar_lea.sflag [#allocation6], 1
    %13 = vsyncpa %s12, 0
    %14 = vsyncpa [#allocation4], 0
    %s15 = scalar_lea.sflag [#allocation4], 1
    %16 = vsyncpa %s15, 0
    loop: start=0, step=1, limit=6
    $region2: #{tpu_custom_call.1} parent=1 // loop_pre_header
      _
    $region3: #{tpu_custom_call.1} parent=1 // loop_header
      %s18 = sphi 0, %s22
      %p19 = scmp.ge.s32.totalorder %s18, 6
      %s25 = sphi 0, %s44
      %s26 = sphi 0, %s40
      %s27 = sphi 0, %s36
      %s28 = sphi 0, %s25
      %s29 = sphi 0, %s26
      %s30 = sphi 0, %s27
      %s31 = sphi 0, %s28
      %s32 = sphi 0, %s29
      %s33 = sphi 0, %s30
      %s49 = sphi 0, %s51
      %s52 = sphi 0, %s49
      %s53 = sphi 0, %s52
      %s69 = sphi 0, %s53
      %s77 = sphi 0, %s79
      %s80 = sphi 0, %s77
      %s81 = sphi 0, %s80
      %s97 = sphi 0, %s81
      %s103 = sphi 0, %s105
      %s106 = sphi 0, %s103
      %s107 = sphi 0, %s106
      %s123 = sphi 0, %s107
      %s131 = sphi 0, %s133
      %s134 = sphi 0, %s131
      %s135 = sphi 0, %s134
      %s151 = sphi 0, %s135
    $region4: #{tpu_custom_call.1} parent=1 // loop_header_branch
      %21 = sbr.rel (%p19) target = $region8
    $region5: #{tpu_custom_call.1} parent=1 // loop_body
      %s23 = ssub.s32 %s18, 1
      %s24 = ssub.s32 %s18, 2
      %s34 = sadd.s32 1, %s27
      %p35 = scmp.ge.s32.totalorder %s34, 2
      %s36 = scalar_select %p35, 0, %s34
      %s37 = sadd.s32 1, %s26
      %s38 = scalar_select %p35, %s37, %s26
      %p39 = scmp.ge.s32.totalorder %s38, 2
      %s40 = scalar_select %p39, 0, %s38
      %s41 = sadd.s32 1, %s25
      %s42 = scalar_select %p39, %s41, %s25
      %p43 = scmp.ge.s32.totalorder %s42, 1
      %s44 = scalar_select %p43, 0, %s42
      %s45 = ssub.s32 %s25, %s44
      %s46 = ssub.s32 %s27, %s36
      %s47 = sor.u32 %s45, %s46
      %p48 = scmp.eq.s32.totalorder %s47, 0
      %s50 = sadd.s32 %s49, 1
      %s51 = scalar_select %p48, %s49, %s50
      %p54 = pneg %p48
      %p55 = scmp.eq.s32.totalorder %s18, 3
      %p56 = por %p54, %p55
      %p57 = scmp.ne.s32.totalorder %s49, %s52
      %p58 = scmp.eq.s32.totalorder %s18, 0
      %p59 = por %p57, %p58
      %p60 = scmp.ne.s32.totalorder %s49, %s52
      %p61 = scmp.eq.s32.totalorder %s23, 3
      %p62 = por %p60, %p61
      %p63 = scmp.ne.s32.totalorder %s52, %s53
      %p64 = scmp.eq.s32.totalorder %s23, 0
      %p65 = por %p63, %p64
      %p66 = scmp.ne.s32.totalorder %s52, %s53
      %p67 = scmp.eq.s32.totalorder %s24, 3
      %p68 = por %p66, %p67
      %p70 = scmp.ne.s32.totalorder %s53, %s69
      %p71 = scmp.eq.s32.totalorder %s24, 0
      %p72 = por %p70, %p71
      %s73 = ssub.s32 %s26, %s40
      %s74 = ssub.s32 %s27, %s36
      %s75 = sor.u32 %s73, %s74
      %p76 = scmp.eq.s32.totalorder %s75, 0
      %s78 = sadd.s32 %s77, 1
      %s79 = scalar_select %p76, %s77, %s78
      %p82 = pneg %p76
      %p83 = scmp.eq.s32.totalorder %s18, 3
      %p84 = por %p82, %p83
      %p85 = scmp.ne.s32.totalorder %s77, %s80
      %p86 = scmp.eq.s32.totalorder %s18, 0
      %p87 = por %p85, %p86
      %p88 = scmp.ne.s32.totalorder %s77, %s80
      %p89 = scmp.eq.s32.totalorder %s23, 3
      %p90 = por %p88, %p89
      %p91 = scmp.ne.s32.totalorder %s80, %s81
      %p92 = scmp.eq.s32.totalorder %s23, 0
      %p93 = por %p91, %p92
      %p94 = scmp.ne.s32.totalorder %s80, %s81
      %p95 = scmp.eq.s32.totalorder %s24, 3
      %p96 = por %p94, %p95
      %p98 = scmp.ne.s32.totalorder %s81, %s97
      %p99 = scmp.eq.s32.totalorder %s24, 0
      %p100 = por %p98, %p99
      %s101 = ssub.s32 %s26, %s40
      %p102 = scmp.eq.s32.totalorder %s101, 0
      %s104 = sadd.s32 %s103, 1
      %s105 = scalar_select %p102, %s103, %s104
      %p108 = pneg %p102
      %p109 = scmp.eq.s32.totalorder %s18, 3
      %p110 = por %p108, %p109
      %p111 = scmp.ne.s32.totalorder %s103, %s106
      %p112 = scmp.eq.s32.totalorder %s18, 0
      %p113 = por %p111, %p112
      %p114 = scmp.ne.s32.totalorder %s103, %s106
      %p115 = scmp.eq.s32.totalorder %s23, 3
      %p116 = por %p114, %p115
      %p117 = scmp.ne.s32.totalorder %s106, %s107
      %p118 = scmp.eq.s32.totalorder %s23, 0
      %p119 = por %p117, %p118
      %p120 = scmp.ne.s32.totalorder %s106, %s107
      %p121 = scmp.eq.s32.totalorder %s24, 3
      %p122 = por %p120, %p121
      %p124 = scmp.ne.s32.totalorder %s107, %s123
      %p125 = scmp.eq.s32.totalorder %s24, 0
      %p126 = por %p124, %p125
      %s127 = ssub.s32 %s25, %s44
      %s128 = ssub.s32 %s26, %s40
      %s129 = sor.u32 %s127, %s128
      %p130 = scmp.eq.s32.totalorder %s129, 0
      %s132 = sadd.s32 %s131, 1
      %s133 = scalar_select %p130, %s131, %s132
      %p136 = pneg %p130
      %p137 = scmp.eq.s32.totalorder %s18, 3
      %p138 = por %p136, %p137
      %p139 = scmp.ne.s32.totalorder %s131, %s134
      %p140 = scmp.eq.s32.totalorder %s18, 0
      %p141 = por %p139, %p140
      %p142 = scmp.ne.s32.totalorder %s131, %s134
      %p143 = scmp.eq.s32.totalorder %s23, 3
      %p144 = por %p142, %p143
      %p145 = scmp.ne.s32.totalorder %s134, %s135
      %p146 = scmp.eq.s32.totalorder %s23, 0
      %p147 = por %p145, %p146
      %p148 = scmp.ne.s32.totalorder %s134, %s135
      %p149 = scmp.eq.s32.totalorder %s24, 3
      %p150 = por %p148, %p149
      %p152 = scmp.ne.s32.totalorder %s135, %s151
      %p153 = scmp.eq.s32.totalorder %s24, 0
      %p154 = por %p152, %p153
      %p155 = scmp.le.s32.totalorder 1, %s18
      %p156 = scmp.lt.s32.totalorder %s18, 5
      %p157 = pnand %p155, %p156
      %p158 = pneg %p157
      // Predicated region
      $region9: #{tpu_custom_call.1} parent=5 // pred_check
        _
      $region10: #{tpu_custom_call.1} parent=5 // pred_check_branch
        %160 = sbr.rel (%p157) target = $region12
      $region11: #{tpu_custom_call.1} parent=5 // pred_region
        %s161 = ssub.s32 %s18, 1
      $region12: #{tpu_custom_call.1} parent=5 // pred_fallthru
        _
      %p162 = scmp.lt.s32.totalorder %s18, 4
      // Predicated region
      $region13: #{tpu_custom_call.1} parent=5 // pred_check
        %p163 = pneg %p162
      $region14: #{tpu_custom_call.1} parent=5 // pred_check_branch
        %165 = sbr.rel (%p163) target = $region16
      $region15: #{tpu_custom_call.1} parent=5 // pred_region
        // Predicated region
        $region17: #{tpu_custom_call.1} parent=15 // pred_check
          %p166 = pneg %p59
        $region18: #{tpu_custom_call.1} parent=15 // pred_check_branch
          %168 = sbr.rel (%p166) target = $region20
        $region19: #{tpu_custom_call.1} parent=15 // pred_region
          %s169 = sand.u32 %s49, 1
          %s170 = scalar_lea.sflag [#allocation3], %s169
          %s171 = sand.u32 %s49, 1
          %s172 = smul.addr %s171, 16
          %s173 = scalar_lea.vmem [#allocation2], %s172
          %s174 = smul.u32 2, %s25
          %s176 = ssub.s32 256, 256
          %177 = vsyncadd %s170, %s176
          %s178 = smul.addr %s174, 2
          %s179 = sadd.s32 %s27, %s178
          %s180 = smul.addr %s179, 128
          %s181 = scalar_lea.hbm %s0, %s180
          %s182 = sshll.u32 %s173, 4
          %s183 = int_to_ptr.vmem [resolvable:$true] %s182
          %188 = dma.hbm_to_vmem [thread:$0]  %s181, 256, %s183, %s170, 256, 128, 8
        $region20: #{tpu_custom_call.1} parent=15 // pred_fallthru
          _
        // Predicated region
        $region21: #{tpu_custom_call.1} parent=15 // pred_check
          %p189 = pneg %p87
        $region22: #{tpu_custom_call.1} parent=15 // pred_check_branch
          %191 = sbr.rel (%p189) target = $region24
        $region23: #{tpu_custom_call.1} parent=15 // pred_region
          %s192 = sand.u32 %s77, 1
          %s193 = scalar_lea.sflag [#allocation6], %s192
          %s194 = sand.u32 %s77, 1
          %s195 = smul.addr %s194, 128
          %s196 = scalar_lea.vmem [#allocation5], %s195
          %s197 = smul.u32 16, %s26
          %s199 = ssub.s32 2048, 2048
          %200 = vsyncadd %s193, %s199
          %s201 = smul.addr %s197, 2
          %s202 = sadd.s32 %s27, %s201
          %s203 = smul.addr %s202, 128
          %s204 = scalar_lea.hbm %s1, %s203
          %s205 = sshll.u32 %s196, 4
          %s206 = int_to_ptr.vmem [resolvable:$true] %s205
          %211 = dma.hbm_to_vmem [thread:$0]  %s204, 2048, %s206, %s193, 256, 128, 8
        $region24: #{tpu_custom_call.1} parent=15 // pred_fallthru
          _
        // Predicated region
        $region25: #{tpu_custom_call.1} parent=15 // pred_check
          %p212 = pneg %p113
        $region26: #{tpu_custom_call.1} parent=15 // pred_check_branch
          %214 = sbr.rel (%p212) target = $region28
        $region27: #{tpu_custom_call.1} parent=15 // pred_region
          %p215 = scmp.lt.s32.totalorder %s26, 1
          %s216 = scalar_select %p215, %s26, 1
          %s217 = scalar_lea.vmem %s2, %s216
        $region28: #{tpu_custom_call.1} parent=15 // pred_fallthru
          _
      $region16: #{tpu_custom_call.1} parent=5 // pred_fallthru
        _
      %p218 = scmp.le.s32.totalorder 1, %s18
      %p219 = scmp.lt.s32.totalorder %s18, 5
      %p220 = pnand %p218, %p219
      %p221 = pneg %p220
      // Predicated region
      $region29: #{tpu_custom_call.1} parent=5 // pred_check
        _
      $region30: #{tpu_custom_call.1} parent=5 // pred_check_branch
        %223 = sbr.rel (%p220) target = $region32
      $region31: #{tpu_custom_call.1} parent=5 // pred_region
        %s224 = ssub.s32 %s18, 1
        %s225 = sand.u32 %s52, 1
        %s226 = scalar_lea.sflag [#allocation3], %s225
        %s227 = sand.u32 %s52, 1
        %s228 = smul.addr %s227, 16
        %s229 = scalar_lea.vmem [#allocation2], %s228
        // Predicated region
        $region33: #{tpu_custom_call.1} parent=31 // pred_check
          %p230 = pneg %p65
        $region34: #{tpu_custom_call.1} parent=31 // pred_check_branch
          %232 = sbr.rel (%p230) target = $region36
        $region35: #{tpu_custom_call.1} parent=31 // pred_region
          %233 = dma.done %s226, 256
        $region36: #{tpu_custom_call.1} parent=31 // pred_fallthru
          _
        %s234 = sand.u32 %s80, 1
        %s235 = scalar_lea.sflag [#allocation6], %s234
        %s236 = sand.u32 %s80, 1
        %s237 = smul.addr %s236, 128
        %s238 = scalar_lea.vmem [#allocation5], %s237
        // Predicated region
        $region37: #{tpu_custom_call.1} parent=31 // pred_check
          %p239 = pneg %p93
        $region38: #{tpu_custom_call.1} parent=31 // pred_check_branch
          %241 = sbr.rel (%p239) target = $region40
        $region39: #{tpu_custom_call.1} parent=31 // pred_region
          %242 = dma.done %s235, 2048
        $region40: #{tpu_custom_call.1} parent=31 // pred_fallthru
          _
        %s243 = sand.u32 %s52, 1
        %s244 = scalar_lea.sflag [#allocation3], %s243
        %s245 = sand.u32 %s52, 1
        %s246 = smul.addr %s245, 16
        %s247 = scalar_lea.vmem [#allocation2], %s246
        %p248 = pneg %p65
        %p249 = pneg %p62
        %s250 = sand.u32 %s80, 1
        %s251 = scalar_lea.sflag [#allocation6], %s250
        %s252 = sand.u32 %s80, 1
        %s253 = smul.addr %s252, 128
        %s254 = scalar_lea.vmem [#allocation5], %s253
        %p255 = pneg %p93
        %p256 = pneg %p90
        %p257 = scmp.lt.s32.totalorder %s29, 1
        %s258 = scalar_select %p257, %s29, 1
        %s259 = scalar_lea.vmem %s2, %s258
        %p260 = pneg %p119
        %p261 = pneg %p116
        %p262 = pneg %p147
        %p263 = pneg %p144
        %s264 = sand.u32 %s134, 1
        %s265 = scalar_lea.sflag [#allocation4], %s264
        %s266 = sand.u32 %s134, 1
        %s267 = smul.addr %s266, 16
        %s268 = scalar_lea.vmem [#allocation7], %s267
        %s269 = smul.u32 2, %s28
        %s270 = smul.u32 16, %s29
        %p271 = scmp.lt.s32.totalorder %s29, 1
        %s272 = scalar_select %p271, %s29, 1
        %s273 = scalar_lea.vmem %s2, %s272
        %s274 = smul.u32 2, %s28
        %p275 = scmp.eq.s32.totalorder %s30, 0
        // Predicated region
        $region41: #{tpu_custom_call.1} parent=31 // pred_check
          %p276 = pneg %p275
        $region42: #{tpu_custom_call.1} parent=31 // pred_check_branch
          %278 = sbr.rel (%p276) target = $region44
        $region43: #{tpu_custom_call.1} parent=31 // pred_region
          %v279 = vld [vmem:[%s273] sm:$0x1]
          %v281 = vlaneseq
          %v282 = vshrl.u32 %v281, 7
          %v283 = vsub.s32 0, %v282
          %v284 = vrot.slane %v279, %v283
          %286 = vst [vmem:[%s268] sm:$0xff] %v284
          %287 = vst [vmem:[%s268 + $0x8] sm:$0xff] %v284
        $region44: #{tpu_custom_call.1} parent=31 // pred_fallthru
          _
        %v288 = vld [vmem:[%s268] sm:$0xff]
        %v289 = vld [vmem:[%s268 + $0x8] sm:$0xff]
        %v290 = vld [vmem:[%s229] sm:$0xff]
        %v291 = vld [vmem:[%s229 + $0x8] sm:$0xff]
        %v292 = vld [vmem:[%s238] sm:$0xff]
        %v293 = vld [vmem:[%s238 + $0x8] sm:$0xff]
        %v294 = vld [vmem:[%s238 + $0x10] sm:$0xff]
        %v295 = vld [vmem:[%s238 + $0x18] sm:$0xff]
        %v296 = vld [vmem:[%s238 + $0x20] sm:$0xff]
        %v297 = vld [vmem:[%s238 + $0x28] sm:$0xff]
        %v298 = vld [vmem:[%s238 + $0x30] sm:$0xff]
        %v299 = vld [vmem:[%s238 + $0x38] sm:$0xff]
        %v300 = vld [vmem:[%s238 + $0x40] sm:$0xff]
        %v301 = vld [vmem:[%s238 + $0x48] sm:$0xff]
        %v302 = vld [vmem:[%s238 + $0x50] sm:$0xff]
        %v303 = vld [vmem:[%s238 + $0x58] sm:$0xff]
        %v304 = vld [vmem:[%s238 + $0x60] sm:$0xff]
        %v305 = vld [vmem:[%s238 + $0x68] sm:$0xff]
        %v306 = vld [vmem:[%s238 + $0x70] sm:$0xff]
        %v307 = vld [vmem:[%s238 + $0x78] sm:$0xff]
        %308 = vmatprep.subr.mxu0 0.0
        %309 = vmatpush1.xpose.msra.mxu0 %v292
        %310 = vmatprep.subr.mxu0 0.0
        %311 = vmatpush1.xpose.msra.mxu0 %v293
        %312 = vmatprep.subr.mxu0 0.0
        %313 = vmatpush1.xpose.msra.mxu0 %v294
        %314 = vmatprep.subr.mxu0 0.0
        %315 = vmatpush1.xpose.msra.mxu0 %v295
        %316 = vmatprep.subr.mxu0 0.0
        %317 = vmatpush1.xpose.msra.mxu0 %v296
        %318 = vmatprep.subr.mxu0 0.0
        %319 = vmatpush1.xpose.msra.mxu0 %v297
        %320 = vmatprep.subr.mxu0 0.0
        %321 = vmatpush1.xpose.msra.mxu0 %v298
        %322 = vmatprep.subr.mxu0 0.0
        %323 = vmatpush1.xpose.msra.mxu0 %v299
        %324 = vmatprep.subr.mxu0 0.0
        %325 = vmatpush1.xpose.msra.mxu0 %v300
        %326 = vmatprep.subr.mxu0 0.0
        %327 = vmatpush1.xpose.msra.mxu0 %v301
        %328 = vmatprep.subr.mxu0 0.0
        %329 = vmatpush1.xpose.msra.mxu0 %v302
        %330 = vmatprep.subr.mxu0 0.0
        %331 = vmatpush1.xpose.msra.mxu0 %v303
        %332 = vmatprep.subr.mxu0 0.0
        %333 = vmatpush1.xpose.msra.mxu0 %v304
        %334 = vmatprep.subr.mxu0 0.0
        %335 = vmatpush1.xpose.msra.mxu0 %v305
        %336 = vmatprep.subr.mxu0 0.0
        %337 = vmatpush1.xpose.msra.mxu0 %v306
        %338 = vmatprep.subr.mxu0 0.0
        %339 = vmatpush1.xpose.msra.mxu0 %v307
        %340 = vmatprep.subr.mxu0 0.0
        %341 = vmatpush1.xpose.msra.mxu0 0.0
        %342 = vmatprep.subr.mxu0 0.0
        %343 = vmatpush1.xpose.msra.mxu0 0.0
        %344 = vmatprep.subr.mxu0 0.0
        %345 = vmatpush1.xpose.msra.mxu0 0.0
        %346 = vmatprep.subr.mxu0 0.0
        %347 = vmatpush1.xpose.msra.mxu0 0.0
        %348 = vmatprep.subr.mxu0 0.0
        %349 = vmatpush1.xpose.msra.mxu0 0.0
        %350 = vmatprep.subr.mxu0 0.0
        %351 = vmatpush1.xpose.msra.mxu0 0.0
        %352 = vmatprep.subr.mxu0 0.0
        %353 = vmatpush1.xpose.msra.mxu0 0.0
        %354 = vmatprep.subr.mxu0 0.0
        %355 = vmatpush1.xpose.msra.mxu0 0.0
        %356 = vmatprep.subr.mxu0 0.0
        %357 = vmatpush1.xpose.msra.mxu0 0.0
        %358 = vmatprep.subr.mxu0 0.0
        %359 = vmatpush1.xpose.msra.mxu0 0.0
        %360 = vmatprep.subr.mxu0 0.0
        %361 = vmatpush1.xpose.msra.mxu0 0.0
        %362 = vmatprep.subr.mxu0 0.0
        %363 = vmatpush1.xpose.msra.mxu0 0.0
        %364 = vmatprep.subr.mxu0 0.0
        %365 = vmatpush1.xpose.msra.mxu0 0.0
        %366 = vmatprep.subr.mxu0 0.0
        %367 = vmatpush1.xpose.msra.mxu0 0.0
        %368 = vmatprep.subr.mxu0 0.0
        %369 = vmatpush1.xpose.msra.mxu0 0.0
        %370 = vmatprep.subr.mxu0 0.0
        %371 = vmatpush1.xpose.msra.mxu0 0.0
        %372 = vmatprep.mubr.f32.mxu0 0.0
        %373 = vmatmul.mubr.f32.gmra.mrb[0].mxu0 %v290
        %v374 = vpop.f32.mrb[0].mxu0
        %v375 = vadd.f32 0.0, %v374
        %v376 = vpop.f32.mrb[0].mxu0
        %377 = vmatprep.mubr.f32.mxu0 0.0
        %378 = vmatmul.mubr.f32.gmra.mrb[0].mxu0 %v291
        %v379 = vpop.f32.mrb[0].mxu0
        %v380 = vadd.f32 0.0, %v379
        %v381 = vpop.f32.mrb[0].mxu0
        %382 = vdwg.mxu0
        %v383 = vadd.f32 %v288, %v375
        %v384 = vadd.f32 %v289, %v380
        %385 = vst [vmem:[%s268] sm:$0xff] %v383
        %386 = vst [vmem:[%s268 + $0x8] sm:$0xff] %v384
        %s387 = sand.u32 %s134, 1
        %s388 = scalar_lea.sflag [#allocation4], %s387
        %s389 = sand.u32 %s134, 1
        %s390 = smul.addr %s389, 16
        %s391 = scalar_lea.vmem [#allocation7], %s390
        // Predicated region
        $region45: #{tpu_custom_call.1} parent=31 // pred_check
          %p392 = pneg %p144
        $region46: #{tpu_custom_call.1} parent=31 // pred_check_branch
          %394 = sbr.rel (%p392) target = $region48
        $region47: #{tpu_custom_call.1} parent=31 // pred_region
          %s395 = smul.u32 2, %s28
          %s397 = ssub.s32 256, 256
          %398 = vsyncadd %s388, %s397
          %s399 = smul.addr %s395, 2
          %s400 = sadd.s32 %s29, %s399
          %s401 = smul.addr %s400, 128
          %s402 = scalar_lea.hbm %s3, %s401
          %s403 = sshll.u32 %s391, 4
          %s404 = int_to_ptr.vmem [resolvable:$true] %s403
          %409 = dma.vmem_to_hbm [thread:$0]  %s404, 256, %s402, %s388, 128, 256, 8
        $region48: #{tpu_custom_call.1} parent=31 // pred_fallthru
          _
      $region32: #{tpu_custom_call.1} parent=5 // pred_fallthru
        _
      %p410 = scmp.le.s32.totalorder 2, %s18
      // Predicated region
      $region49: #{tpu_custom_call.1} parent=5 // pred_check
        %p411 = pneg %p410
      $region50: #{tpu_custom_call.1} parent=5 // pred_check_branch
        %413 = sbr.rel (%p411) target = $region52
      $region51: #{tpu_custom_call.1} parent=5 // pred_region
        %s414 = ssub.s32 %s18, 2
        // Predicated region
        $region53: #{tpu_custom_call.1} parent=51 // pred_check
          %p415 = pneg %p150
        $region54: #{tpu_custom_call.1} parent=51 // pred_check_branch
          %417 = sbr.rel (%p415) target = $region56
        $region55: #{tpu_custom_call.1} parent=51 // pred_region
          %s418 = sand.u32 %s135, 1
          %s419 = scalar_lea.sflag [#allocation4], %s418
          %s420 = sand.u32 %s135, 1
          %s421 = smul.addr %s420, 16
          %s422 = scalar_lea.vmem [#allocation7], %s421
          %423 = dma.done %s419, 256
        $region56: #{tpu_custom_call.1} parent=51 // pred_fallthru
          _
      $region52: #{tpu_custom_call.1} parent=5 // pred_fallthru
        _
    $region6: #{tpu_custom_call.1} parent=1 // loop_footer
      %s22 = sadd.s32 1, %s18
    $region7: #{tpu_custom_call.1} parent=1 // loop_footer_branch
      %17 = sbr.rel target = $region3
    $region8: #{tpu_custom_call.1} parent=1 // loop_exit
      _
    %424 = vsyncpa [#allocation3], 1
    %s425 = scalar_lea.sflag [#allocation3], 1
    %426 = vsyncpa %s425, 1
    %427 = vsyncpa [#allocation6], 1
    %s428 = scalar_lea.sflag [#allocation6], 1
    %429 = vsyncpa %s428, 1
    %430 = vsyncpa [#allocation4], 1
    %s431 = scalar_lea.sflag [#allocation4], 1
    %432 = vsyncpa %s431, 1

</llo_original>
